<compile_context>
chip_gen: v7x
topology: tpu7x:2x2x1
jax: 0.10.0
libtpu: 0.0.40
codegen_flags: <defaults>
</compile_context>

<pallas_src>
import functools

import jax
import jax.numpy as jnp
from jax.experimental import pallas as pl
from jax.experimental.pallas import tpu as pltpu


# Constant-slab plane indices.
_SRC0, _SRC1, _STER0, _STER1 = 0, 1, 2, 3
_TY0, _TY1, _TX0, _TX1 = 4, 5, 6, 7
_WREG_Y, _WREG_X = 8, 9
_A_L, _A_R, _A_T, _A_B = 10, 11, 12, 13
_BC_COL, _BC_ROW = 14, 15
_N_FIXED = 16          # face-weight planes start at this index


def _optimesh_kernel(transform_ref,          # SMEM (K, 4)          [a, b, t1, t2]
                     const_ref,              # VMEM (16+K, H, W)    constant slab
                     mesh_ref,               # VMEM (2, H, W)       per-call mesh
                     out_ref,                # SMEM (1, 1)          scalar energy
                     *, K, half_hc, half_wc, bend_y, bend_x,
                     lbd_f, lbd_bc, ws, st):
    mesh0 = mesh_ref[0]
    mesh1 = mesh_ref[1]

    src0 = const_ref[_SRC0]
    src1 = const_ref[_SRC1]
    ster0 = const_ref[_STER0]
    ster1 = const_ref[_STER1]
    ty0 = const_ref[_TY0]           # normalized source tangents (y-dir),
    ty1 = const_ref[_TY1]           # zeroed on the invalid (wrapped) row
    tx0 = const_ref[_TX0]           # normalized source tangents (x-dir),
    tx1 = const_ref[_TX1]           # zeroed on the invalid (wrapped) col
    wreg_y = const_ref[_WREG_Y]     # lbd_r-pre-scaled validity mask (y)
    wreg_x = const_ref[_WREG_X]     # lbd_r-pre-scaled validity mask (x)
    a_l = const_ref[_A_L]           # asymmetric-cost positional masks,
    a_r = const_ref[_A_R]           # pre-scaled by lbd_a / (4 * extent)
    a_t = const_ref[_A_T]
    a_b = const_ref[_A_B]
    bc_col = const_ref[_BC_COL]     # 1.0 on first/last column
    bc_row = const_ref[_BC_ROW]     # 1.0 on first/last row

    # Small-magnitude terms accumulate in one plane; the 1e8-scaled boundary
    # residuals get their own plane so they never swamp the small terms.
    acc = jnp.zeros_like(mesh0)

    # ---------------- face objective term ----------------
    # const_ref[_N_FIXED + k] already holds lbd_f/(K*H*W) * face_w[k] * corr.
    reg = 0.0
    for k in range(K):                       # K tiny & static -> unrolled
        ak = transform_ref[k, 0]
        bk = transform_ref[k, 1]
        tk1 = transform_ref[k, 2]
        tk2 = transform_ref[k, 3]
        # target = Sk @ Mu + tk, Sk = [[a, b], [-b, a]]
        d0 = mesh0 - (ak * ster0 + bk * ster1 + tk1)
        d1 = mesh1 - (-bk * ster0 + ak * ster1 + tk2)
        acc = acc + const_ref[_N_FIXED + k] * (d0 * d0 + d1 * d1)
        reg = reg + (ak - st) * (ak - st)
    scalar_terms = (lbd_f * ws / K) * reg

    # -------- line bending & regularization (roll + premasked tangents) -----
    # y / row direction: neighbour(i+1) - current(i); wrapped row is killed by
    # the zeroed tangents (bending) and the pre-scaled mask plane (reg).
    dvy0 = jnp.roll(mesh0, -1, axis=0) - mesh0
    dvy1 = jnp.roll(mesh1, -1, axis=0) - mesh1
    cross_y = dvy0 * ty1 - dvy1 * ty0
    acc = acc + bend_y * (cross_y * cross_y) + wreg_y * (dvy0 * dvy0 + dvy1 * dvy1)

    # x / column direction.
    dvx0 = jnp.roll(mesh0, -1, axis=1) - mesh0
    dvx1 = jnp.roll(mesh1, -1, axis=1) - mesh1
    cross_x = dvx0 * tx1 - dvx1 * tx0
    acc = acc + bend_x * (cross_x * cross_x) + wreg_x * (dvx0 * dvx0 + dvx1 * dvx1)

    # ---------------- asymmetric cost term ----------------
    # Positional masks (and the lbd_a / mean scaling) live in a_l..a_b; only
    # the data-dependent comparisons remain at runtime.
    dl = mesh1 + half_wc
    dr = mesh1 - half_wc
    dt = mesh0 + half_hc
    db = mesh0 - half_hc
    acc = acc + a_l * jnp.where(mesh1 > -half_wc, dl * dl, 0.0)
    acc = acc + a_r * jnp.where(mesh1 < half_wc, dr * dr, 0.0)
    acc = acc + a_t * jnp.where(mesh0 > -half_hc, dt * dt, 0.0)
    acc = acc + a_b * jnp.where(mesh0 < half_hc, db * db, 0.0)

    # ---------------- boundary conditions (separate accumulator) ------------
    dbc1 = mesh1 - src1
    dbc0 = mesh0 - src0
    bc = bc_col * (dbc1 * dbc1) + bc_row * (dbc0 * dbc0)

    out_ref[0, 0] = jnp.sum(acc) + lbd_bc * jnp.sum(bc) + scalar_terms


def make_optimesh_energy(source_mesh, stereographic_mesh, face_weights,
                         correction_strength, *, padding=4, lbd_f=4.0,
                         lbd_b=2.0, lbd_r=0.5, lbd_a=4.0, lbd_bc=1e8):
    """Mirrors Optimesh.__init__ -> returns energy(mesh, transform)."""
    source_mesh = jnp.asarray(source_mesh, jnp.float32)
    stereographic_mesh = jnp.asarray(stereographic_mesh, jnp.float32)
    face_weights = jnp.asarray(face_weights, jnp.float32)
    correction_strength = jnp.asarray(correction_strength, jnp.float32)

    H, W = source_mesh.shape[:2]
    K = int(face_weights.shape[0])
    p = int(padding)

    # ---------------- constructor-time constant planes ----------------
    src0, src1 = source_mesh[..., 0], source_mesh[..., 1]
    ster0, ster1 = stereographic_mesh[..., 0], stereographic_mesh[..., 1]

    # Normalized source tangents, zero-padded on the wrapped row / column.
    dpy = source_mesh[1:] - source_mesh[:-1]                       # (H-1, W, 2)
    dpy = dpy / jnp.linalg.norm(dpy, axis=-1, keepdims=True)
    zrow = jnp.zeros((1, W), jnp.float32)
    ty0 = jnp.concatenate([dpy[..., 0], zrow], axis=0)
    ty1 = jnp.concatenate([dpy[..., 1], zrow], axis=0)
    dpx = source_mesh[:, 1:] - source_mesh[:, :-1]                 # (H, W-1, 2)
    dpx = dpx / jnp.linalg.norm(dpx, axis=-1, keepdims=True)
    zcol = jnp.zeros((H, 1), jnp.float32)
    tx0 = jnp.concatenate([dpx[..., 0], zcol], axis=1)
    tx1 = jnp.concatenate([dpx[..., 1], zcol], axis=1)

    row = jnp.broadcast_to(jnp.arange(H)[:, None], (H, W))
    col = jnp.broadcast_to(jnp.arange(W)[None, :], (H, W))

    # Line-bending / regularization mean+lambda scales (compile-time floats).
    bend_y = float(lbd_b) / (2.0 * (H - 1) * W)
    bend_x = float(lbd_b) / (2.0 * H * (W - 1))
    regl_y = float(lbd_r) / (2.0 * (H - 1) * W)
    regl_x = float(lbd_r) / (2.0 * H * (W - 1))
    wreg_y = (row < H - 1).astype(jnp.float32) * regl_y
    wreg_x = (col < W - 1).astype(jnp.float32) * regl_x

    # Asymmetric-cost positional masks, pre-scaled by lbd_a / (4 * extent).
    sc_lr = float(lbd_a) / (4.0 * (H - 2 * p))
    sc_tb = float(lbd_a) / (4.0 * (W - 2 * p))
    in_rows = (row >= p) & (row < H - p)
    in_cols = (col >= p) & (col < W - p)
    a_l = (in_rows & (col == p)).astype(jnp.float32) * sc_lr
    a_r = (in_rows & (col == W - p - 1)).astype(jnp.float32) * sc_lr
    a_t = (in_cols & (row == p)).astype(jnp.float32) * sc_tb
    a_b = (in_cols & (row == H - p - 1)).astype(jnp.float32) * sc_tb

    # Boundary-condition masks (corners intentionally counted in both sets,
    # matching the reference concatenation).
    bc_col = ((col == 0) | (col == W - 1)).astype(jnp.float32)
    bc_row = ((row == 0) | (row == H - 1)).astype(jnp.float32)

    # Face weights pre-scaled by lbd_f / (K*H*W) and correction strength.
    face_scale = float(lbd_f) / (K * H * W)
    fwcs = face_scale * face_weights * correction_strength[None]   # (K, H, W)

    const_planes = jnp.concatenate(
        [jnp.stack([src0, src1, ster0, ster1, ty0, ty1, tx0, tx1,
                    wreg_y, wreg_x, a_l, a_r, a_t, a_b, bc_col, bc_row], axis=0),
         fwcs], axis=0).astype(jnp.float32)                        # (16+K, H, W)

    # Interior extents baked as compile-time immediates.
    hc = float(source_mesh[H - p - 1, W - p - 1, 0] - source_mesh[p, p, 0])
    wc = float(source_mesh[H - p - 1, W - p - 1, 1] - source_mesh[p, p, 1])

    kernel = functools.partial(
        _optimesh_kernel,
        K=K, half_hc=0.5 * hc, half_wc=0.5 * wc,
        bend_y=bend_y, bend_x=bend_x,
        lbd_f=float(lbd_f), lbd_bc=float(lbd_bc), ws=2000.0, st=1.0)

    call = pl.pallas_call(
        kernel,
        out_shape=jax.ShapeDtypeStruct((1, 1), jnp.float32),
        in_specs=[pl.BlockSpec(memory_space=pltpu.MemorySpace.SMEM),   # transform
                  pl.BlockSpec(memory_space=pltpu.MemorySpace.VMEM),   # const slab
                  pl.BlockSpec(memory_space=pltpu.MemorySpace.VMEM)],  # mesh (2,H,W)
        out_specs=pl.BlockSpec(memory_space=pltpu.MemorySpace.SMEM),
    )

    @jax.jit
    def energy(mesh, transform):
        # One transpose to channel-first; the channel split happens in-kernel
        # on contiguous planes (no strided slices in the host graph).
        mesh_cf = jnp.transpose(mesh.astype(jnp.float32), (2, 0, 1))
        out = call(transform.astype(jnp.float32), const_planes, mesh_cf)
        return out[0, 0]

    return energy


# ---------------- pure-JAX reference (mirrors the torch code) ----------------
def ref_energy(mesh, transform, source_mesh, ster_mesh, face_weights, corr,
               padding=4, lbd_f=4.0, lbd_b=2.0, lbd_r=0.5, lbd_a=4.0, lbd_bc=1e8):
    K = face_weights.shape[0]
    ws, st = 2000.0, 1.0
    e_f = 0.0
    for k in range(K):
        ak, bk, tk1, tk2 = transform[k]
        Sk = jnp.stack([jnp.stack([ak, bk]), jnp.stack([-bk, ak])])
        tk = jnp.stack([tk1, tk2])
        target = jnp.einsum('ij,hwj->hwi', Sk, ster_mesh) + tk
        dist = jnp.sum((mesh - target) ** 2, axis=-1)
        e_f += jnp.mean(face_weights[k] * corr * dist) + ws * (ak - st) ** 2
    e_f = e_f / K

    dvy = mesh[1:] - mesh[:-1]
    dpy = source_mesh[1:] - source_mesh[:-1]
    dpy = dpy / jnp.linalg.norm(dpy, axis=-1, keepdims=True)
    cross_y = dvy[..., 0] * dpy[..., 1] - dvy[..., 1] * dpy[..., 0]
    e_b = jnp.mean(cross_y ** 2) / 2.0
    dvx = mesh[:, 1:] - mesh[:, :-1]
    dpx = source_mesh[:, 1:] - source_mesh[:, :-1]
    dpx = dpx / jnp.linalg.norm(dpx, axis=-1, keepdims=True)
    cross_x = dvx[..., 0] * dpx[..., 1] - dvx[..., 1] * dpx[..., 0]
    e_b += jnp.mean(cross_x ** 2) / 2.0
    e_r = jnp.mean(jnp.sum(dvy ** 2, -1)) / 2.0 + jnp.mean(jnp.sum(dvx ** 2, -1)) / 2.0

    p = padding
    Hc = source_mesh[-p - 1, -p - 1, 0] - source_mesh[p, p, 0]
    Wc = source_mesh[-p - 1, -p - 1, 1] - source_mesh[p, p, 1]
    orig = mesh[p:-p, p:-p]
    vl_x = orig[:, 0, 1]
    vr_x = orig[:, -1, 1]
    vt_y = orig[0, :, 0]
    vb_y = orig[-1, :, 0]
    E_l = jnp.where(vl_x > -Wc / 2, 1.0, 0.0) * (vl_x + Wc / 2) ** 2
    E_rr = jnp.where(vr_x < Wc / 2, 1.0, 0.0) * (vr_x - Wc / 2) ** 2
    E_t = jnp.where(vt_y > -Hc / 2, 1.0, 0.0) * (vt_y + Hc / 2) ** 2
    E_bb = jnp.where(vb_y < Hc / 2, 1.0, 0.0) * (vb_y - Hc / 2) ** 2
    e_a = (E_l.mean() + E_rr.mean() + E_t.mean() + E_bb.mean()) / 4.0

    v_b = jnp.concatenate([mesh[:, 0, 1], mesh[:, -1, 1], mesh[0, :, 0], mesh[-1, :, 0]])
    p_b = jnp.concatenate([source_mesh[:, 0, 1], source_mesh[:, -1, 1],
                           source_mesh[0, :, 0], source_mesh[-1, :, 0]])
    e_bc = jnp.sum((v_b - p_b) ** 2)

    return lbd_f * e_f + lbd_b * e_b + lbd_r * e_r + lbd_a * e_a + lbd_bc * e_bc


if __name__ == "__main__":
    H = Wn = 16
    K = 2
    padding = 4

    key = jax.random.PRNGKey(0)
    k1, k2, k3, k4, k5 = jax.random.split(key, 5)

    # constructor inputs (deterministic)
    ys = jnp.linspace(-1.0, 1.0, H)
    xs = jnp.linspace(-1.5, 1.5, Wn)
    yy, xx = jnp.meshgrid(ys, xs, indexing="ij")
    source_mesh = jnp.stack([yy, xx], axis=-1).astype(jnp.float32)          # (H, W, 2)
    stereographic_mesh = (source_mesh
                          + 0.05 * jax.random.normal(k1, (H, Wn, 2))).astype(jnp.float32)
    face_weights = jax.random.uniform(k2, (K, H, Wn), dtype=jnp.float32)
    correction_strength = jax.random.uniform(k3, (H, Wn), dtype=jnp.float32)

    energy_fn = make_optimesh_energy(source_mesh, stereographic_mesh,
                                     face_weights, correction_strength,
                                     padding=padding)

    # --- parameters exactly as in Optimesh.__init__ ---
    mesh_init = source_mesh
    transform_init = jnp.tile(jnp.array([[1.0, 0.0, 0.0, 0.0]], jnp.float32), (K, 1))

    e0 = jax.block_until_ready(energy_fn(mesh_init, transform_init))
    r0 = ref_energy(mesh_init, transform_init, source_mesh, stereographic_mesh,
                    face_weights, correction_strength, padding=padding)
    assert jnp.allclose(e0, r0, rtol=1e-3, atol=1e-3), (e0, r0)

    # --- perturbed parameters to exercise every energy term ---
    mesh_p = mesh_init + 0.01 * jax.random.normal(k4, (H, Wn, 2), dtype=jnp.float32)
    transform_p = transform_init + 0.01 * jax.random.normal(k5, (K, 4), dtype=jnp.float32)

    e1 = jax.block_until_ready(energy_fn(mesh_p, transform_p))
    r1 = ref_energy(mesh_p, transform_p, source_mesh, stereographic_mesh,
                    face_weights, correction_strength, padding=padding)
    assert jnp.allclose(e1, r1, rtol=1e-3, atol=1e-3), (e1, r1)

    print("KERNEL_OK")
</pallas_src>

<mosaic_0001>
module attributes {stable_mosaic.version = 11 : i64} {
  func.func @_optimesh_kernel(%arg0: memref<2x4xf32, #tpu.memory_space<smem>>, %arg1: memref<18x16x16xf32, #tpu.memory_space<vmem>>, %arg2: memref<2x16x16xf32, #tpu.memory_space<vmem>>, %arg3: memref<1x1xf32, #tpu.memory_space<smem>>) attributes {dimension_semantics = [], scalar_prefetch = 0 : i64, scratch_operands = 0 : i64, tpu.core_type = #tpu.core_type<tc>} {
    %c0 = arith.constant 0 : index
    %c0_0 = arith.constant 0 : index
    %c0_1 = arith.constant 0 : index
    %0 = vector.load %arg2[%c0, %c0_0, %c0_1] : memref<2x16x16xf32, #tpu.memory_space<vmem>>, vector<1x16x16xf32>
    %1 = vector.shape_cast %0 : vector<1x16x16xf32> to vector<16x16xf32>
    %c1 = arith.constant 1 : index
    %c0_2 = arith.constant 0 : index
    %c0_3 = arith.constant 0 : index
    %2 = vector.load %arg2[%c1, %c0_2, %c0_3] : memref<2x16x16xf32, #tpu.memory_space<vmem>>, vector<1x16x16xf32>
    %3 = vector.shape_cast %2 : vector<1x16x16xf32> to vector<16x16xf32>
    %c0_4 = arith.constant 0 : index
    %c0_5 = arith.constant 0 : index
    %c0_6 = arith.constant 0 : index
    %4 = vector.load %arg1[%c0_4, %c0_5, %c0_6] : memref<18x16x16xf32, #tpu.memory_space<vmem>>, vector<1x16x16xf32>
    %5 = vector.shape_cast %4 : vector<1x16x16xf32> to vector<16x16xf32>
    %c1_7 = arith.constant 1 : index
    %c0_8 = arith.constant 0 : index
    %c0_9 = arith.constant 0 : index
    %6 = vector.load %arg1[%c1_7, %c0_8, %c0_9] : memref<18x16x16xf32, #tpu.memory_space<vmem>>, vector<1x16x16xf32>
    %7 = vector.shape_cast %6 : vector<1x16x16xf32> to vector<16x16xf32>
    %c2 = arith.constant 2 : index
    %c0_10 = arith.constant 0 : index
    %c0_11 = arith.constant 0 : index
    %8 = vector.load %arg1[%c2, %c0_10, %c0_11] : memref<18x16x16xf32, #tpu.memory_space<vmem>>, vector<1x16x16xf32>
    %9 = vector.shape_cast %8 : vector<1x16x16xf32> to vector<16x16xf32>
    %c3 = arith.constant 3 : index
    %c0_12 = arith.constant 0 : index
    %c0_13 = arith.constant 0 : index
    %10 = vector.load %arg1[%c3, %c0_12, %c0_13] : memref<18x16x16xf32, #tpu.memory_space<vmem>>, vector<1x16x16xf32>
    %11 = vector.shape_cast %10 : vector<1x16x16xf32> to vector<16x16xf32>
    %c4 = arith.constant 4 : index
    %c0_14 = arith.constant 0 : index
    %c0_15 = arith.constant 0 : index
    %12 = vector.load %arg1[%c4, %c0_14, %c0_15] : memref<18x16x16xf32, #tpu.memory_space<vmem>>, vector<1x16x16xf32>
    %13 = vector.shape_cast %12 : vector<1x16x16xf32> to vector<16x16xf32>
    %c5 = arith.constant 5 : index
    %c0_16 = arith.constant 0 : index
    %c0_17 = arith.constant 0 : index
    %14 = vector.load %arg1[%c5, %c0_16, %c0_17] : memref<18x16x16xf32, #tpu.memory_space<vmem>>, vector<1x16x16xf32>
    %15 = vector.shape_cast %14 : vector<1x16x16xf32> to vector<16x16xf32>
    %c6 = arith.constant 6 : index
    %c0_18 = arith.constant 0 : index
    %c0_19 = arith.constant 0 : index
    %16 = vector.load %arg1[%c6, %c0_18, %c0_19] : memref<18x16x16xf32, #tpu.memory_space<vmem>>, vector<1x16x16xf32>
    %17 = vector.shape_cast %16 : vector<1x16x16xf32> to vector<16x16xf32>
    %c7 = arith.constant 7 : index
    %c0_20 = arith.constant 0 : index
    %c0_21 = arith.constant 0 : index
    %18 = vector.load %arg1[%c7, %c0_20, %c0_21] : memref<18x16x16xf32, #tpu.memory_space<vmem>>, vector<1x16x16xf32>
    %19 = vector.shape_cast %18 : vector<1x16x16xf32> to vector<16x16xf32>
    %c8 = arith.constant 8 : index
    %c0_22 = arith.constant 0 : index
    %c0_23 = arith.constant 0 : index
    %20 = vector.load %arg1[%c8, %c0_22, %c0_23] : memref<18x16x16xf32, #tpu.memory_space<vmem>>, vector<1x16x16xf32>
    %21 = vector.shape_cast %20 : vector<1x16x16xf32> to vector<16x16xf32>
    %c9 = arith.constant 9 : index
    %c0_24 = arith.constant 0 : index
    %c0_25 = arith.constant 0 : index
    %22 = vector.load %arg1[%c9, %c0_24, %c0_25] : memref<18x16x16xf32, #tpu.memory_space<vmem>>, vector<1x16x16xf32>
    %23 = vector.shape_cast %22 : vector<1x16x16xf32> to vector<16x16xf32>
    %c10 = arith.constant 10 : index
    %c0_26 = arith.constant 0 : index
    %c0_27 = arith.constant 0 : index
    %24 = vector.load %arg1[%c10, %c0_26, %c0_27] : memref<18x16x16xf32, #tpu.memory_space<vmem>>, vector<1x16x16xf32>
    %25 = vector.shape_cast %24 : vector<1x16x16xf32> to vector<16x16xf32>
    %c11 = arith.constant 11 : index
    %c0_28 = arith.constant 0 : index
    %c0_29 = arith.constant 0 : index
    %26 = vector.load %arg1[%c11, %c0_28, %c0_29] : memref<18x16x16xf32, #tpu.memory_space<vmem>>, vector<1x16x16xf32>
    %27 = vector.shape_cast %26 : vector<1x16x16xf32> to vector<16x16xf32>
    %c12 = arith.constant 12 : index
    %c0_30 = arith.constant 0 : index
    %c0_31 = arith.constant 0 : index
    %28 = vector.load %arg1[%c12, %c0_30, %c0_31] : memref<18x16x16xf32, #tpu.memory_space<vmem>>, vector<1x16x16xf32>
    %29 = vector.shape_cast %28 : vector<1x16x16xf32> to vector<16x16xf32>
    %c13 = arith.constant 13 : index
    %c0_32 = arith.constant 0 : index
    %c0_33 = arith.constant 0 : index
    %30 = vector.load %arg1[%c13, %c0_32, %c0_33] : memref<18x16x16xf32, #tpu.memory_space<vmem>>, vector<1x16x16xf32>
    %31 = vector.shape_cast %30 : vector<1x16x16xf32> to vector<16x16xf32>
    %c14 = arith.constant 14 : index
    %c0_34 = arith.constant 0 : index
    %c0_35 = arith.constant 0 : index
    %32 = vector.load %arg1[%c14, %c0_34, %c0_35] : memref<18x16x16xf32, #tpu.memory_space<vmem>>, vector<1x16x16xf32>
    %33 = vector.shape_cast %32 : vector<1x16x16xf32> to vector<16x16xf32>
    %c15 = arith.constant 15 : index
    %c0_36 = arith.constant 0 : index
    %c0_37 = arith.constant 0 : index
    %34 = vector.load %arg1[%c15, %c0_36, %c0_37] : memref<18x16x16xf32, #tpu.memory_space<vmem>>, vector<1x16x16xf32>
    %35 = vector.shape_cast %34 : vector<1x16x16xf32> to vector<16x16xf32>
    %cst = arith.constant 0.000000e+00 : f32
    %36 = vector.broadcast %cst : f32 to vector<16x16xf32>
    %c0_38 = arith.constant 0 : index
    %c0_39 = arith.constant 0 : index
    %37 = memref.load %arg0[%c0_38, %c0_39] : memref<2x4xf32, #tpu.memory_space<smem>>
    %c0_40 = arith.constant 0 : index
    %c1_41 = arith.constant 1 : index
    %38 = memref.load %arg0[%c0_40, %c1_41] : memref<2x4xf32, #tpu.memory_space<smem>>
    %c0_42 = arith.constant 0 : index
    %c2_43 = arith.constant 2 : index
    %39 = memref.load %arg0[%c0_42, %c2_43] : memref<2x4xf32, #tpu.memory_space<smem>>
    %c0_44 = arith.constant 0 : index
    %c3_45 = arith.constant 3 : index
    %40 = memref.load %arg0[%c0_44, %c3_45] : memref<2x4xf32, #tpu.memory_space<smem>>
    %41 = vector.broadcast %37 : f32 to vector<16x16xf32>
    %42 = arith.mulf %41, %9 : vector<16x16xf32>
    %43 = vector.broadcast %38 : f32 to vector<16x16xf32>
    %44 = arith.mulf %43, %11 : vector<16x16xf32>
    %45 = arith.addf %42, %44 : vector<16x16xf32>
    %46 = vector.broadcast %39 : f32 to vector<16x16xf32>
    %47 = arith.addf %45, %46 : vector<16x16xf32>
    %48 = arith.subf %1, %47 : vector<16x16xf32>
    %cst_46 = arith.constant 0.000000e+00 : f32
    %49 = arith.subf %cst_46, %38 : f32
    %50 = vector.broadcast %49 : f32 to vector<16x16xf32>
    %51 = arith.mulf %50, %9 : vector<16x16xf32>
    %52 = vector.broadcast %37 : f32 to vector<16x16xf32>
    %53 = arith.mulf %52, %11 : vector<16x16xf32>
    %54 = arith.addf %51, %53 : vector<16x16xf32>
    %55 = vector.broadcast %40 : f32 to vector<16x16xf32>
    %56 = arith.addf %54, %55 : vector<16x16xf32>
    %57 = arith.subf %3, %56 : vector<16x16xf32>
    %c16 = arith.constant 16 : index
    %c0_47 = arith.constant 0 : index
    %c0_48 = arith.constant 0 : index
    %58 = vector.load %arg1[%c16, %c0_47, %c0_48] : memref<18x16x16xf32, #tpu.memory_space<vmem>>, vector<1x16x16xf32>
    %59 = vector.shape_cast %58 : vector<1x16x16xf32> to vector<16x16xf32>
    %60 = arith.mulf %48, %48 : vector<16x16xf32>
    %61 = arith.mulf %57, %57 : vector<16x16xf32>
    %62 = arith.addf %60, %61 : vector<16x16xf32>
    %63 = arith.mulf %59, %62 : vector<16x16xf32>
    %64 = arith.addf %36, %63 : vector<16x16xf32>
    %cst_49 = arith.constant 1.000000e+00 : f32
    %65 = arith.subf %37, %cst_49 : f32
    %cst_50 = arith.constant 1.000000e+00 : f32
    %66 = arith.subf %37, %cst_50 : f32
    %67 = arith.mulf %65, %66 : f32
    %cst_51 = arith.constant 0.000000e+00 : f32
    %68 = arith.addf %cst_51, %67 : f32
    %c1_52 = arith.constant 1 : index
    %c0_53 = arith.constant 0 : index
    %69 = memref.load %arg0[%c1_52, %c0_53] : memref<2x4xf32, #tpu.memory_space<smem>>
    %c1_54 = arith.constant 1 : index
    %c1_55 = arith.constant 1 : index
    %70 = memref.load %arg0[%c1_54, %c1_55] : memref<2x4xf32, #tpu.memory_space<smem>>
    %c1_56 = arith.constant 1 : index
    %c2_57 = arith.constant 2 : index
    %71 = memref.load %arg0[%c1_56, %c2_57] : memref<2x4xf32, #tpu.memory_space<smem>>
    %c1_58 = arith.constant 1 : index
    %c3_59 = arith.constant 3 : index
    %72 = memref.load %arg0[%c1_58, %c3_59] : memref<2x4xf32, #tpu.memory_space<smem>>
    %73 = vector.broadcast %69 : f32 to vector<16x16xf32>
    %74 = arith.mulf %73, %9 : vector<16x16xf32>
    %75 = vector.broadcast %70 : f32 to vector<16x16xf32>
    %76 = arith.mulf %75, %11 : vector<16x16xf32>
    %77 = arith.addf %74, %76 : vector<16x16xf32>
    %78 = vector.broadcast %71 : f32 to vector<16x16xf32>
    %79 = arith.addf %77, %78 : vector<16x16xf32>
    %80 = arith.subf %1, %79 : vector<16x16xf32>
    %cst_60 = arith.constant 0.000000e+00 : f32
    %81 = arith.subf %cst_60, %70 : f32
    %82 = vector.broadcast %81 : f32 to vector<16x16xf32>
    %83 = arith.mulf %82, %9 : vector<16x16xf32>
    %84 = vector.broadcast %69 : f32 to vector<16x16xf32>
    %85 = arith.mulf %84, %11 : vector<16x16xf32>
    %86 = arith.addf %83, %85 : vector<16x16xf32>
    %87 = vector.broadcast %72 : f32 to vector<16x16xf32>
    %88 = arith.addf %86, %87 : vector<16x16xf32>
    %89 = arith.subf %3, %88 : vector<16x16xf32>
    %c17 = arith.constant 17 : index
    %c0_61 = arith.constant 0 : index
    %c0_62 = arith.constant 0 : index
    %90 = vector.load %arg1[%c17, %c0_61, %c0_62] : memref<18x16x16xf32, #tpu.memory_space<vmem>>, vector<1x16x16xf32>
    %91 = vector.shape_cast %90 : vector<1x16x16xf32> to vector<16x16xf32>
    %92 = arith.mulf %80, %80 : vector<16x16xf32>
    %93 = arith.mulf %89, %89 : vector<16x16xf32>
    %94 = arith.addf %92, %93 : vector<16x16xf32>
    %95 = arith.mulf %91, %94 : vector<16x16xf32>
    %96 = arith.addf %64, %95 : vector<16x16xf32>
    %cst_63 = arith.constant 1.000000e+00 : f32
    %97 = arith.subf %69, %cst_63 : f32
    %cst_64 = arith.constant 1.000000e+00 : f32
    %98 = arith.subf %69, %cst_64 : f32
    %99 = arith.mulf %97, %98 : f32
    %100 = arith.addf %68, %99 : f32
    %cst_65 = arith.constant 4.000000e+03 : f32
    %101 = arith.mulf %cst_65, %100 : f32
    %102 = vector.extract_strided_slice %1 {offsets = [1, 0], sizes = [15, 16], strides = [1, 1]} : vector<16x16xf32> to vector<15x16xf32>
    %103 = vector.extract_strided_slice %1 {offsets = [0, 0], sizes = [1, 16], strides = [1, 1]} : vector<16x16xf32> to vector<1x16xf32>
    %104 = tpu.concatenate %102, %103 in 0 : vector<15x16xf32>, vector<1x16xf32> -> vector<16x16xf32>
    %105 = arith.subf %104, %1 : vector<16x16xf32>
    %106 = vector.extract_strided_slice %3 {offsets = [1, 0], sizes = [15, 16], strides = [1, 1]} : vector<16x16xf32> to vector<15x16xf32>
    %107 = vector.extract_strided_slice %3 {offsets = [0, 0], sizes = [1, 16], strides = [1, 1]} : vector<16x16xf32> to vector<1x16xf32>
    %108 = tpu.concatenate %106, %107 in 0 : vector<15x16xf32>, vector<1x16xf32> -> vector<16x16xf32>
    %109 = arith.subf %108, %3 : vector<16x16xf32>
    %110 = arith.mulf %105, %15 : vector<16x16xf32>
    %111 = arith.mulf %109, %13 : vector<16x16xf32>
    %112 = arith.subf %110, %111 : vector<16x16xf32>
    %113 = arith.mulf %112, %112 : vector<16x16xf32>
    %cst_66 = arith.constant 0.00416666688 : f32
    %114 = vector.broadcast %cst_66 : f32 to vector<16x16xf32>
    %115 = arith.mulf %114, %113 : vector<16x16xf32>
    %116 = arith.addf %96, %115 : vector<16x16xf32>
    %117 = arith.mulf %105, %105 : vector<16x16xf32>
    %118 = arith.mulf %109, %109 : vector<16x16xf32>
    %119 = arith.addf %117, %118 : vector<16x16xf32>
    %120 = arith.mulf %21, %119 : vector<16x16xf32>
    %121 = arith.addf %116, %120 : vector<16x16xf32>
    %122 = vector.extract_strided_slice %1 {offsets = [0, 1], sizes = [16, 15], strides = [1, 1]} : vector<16x16xf32> to vector<16x15xf32>
    %123 = vector.extract_strided_slice %1 {offsets = [0, 0], sizes = [16, 1], strides = [1, 1]} : vector<16x16xf32> to vector<16x1xf32>
    %124 = tpu.concatenate %122, %123 in 1 : vector<16x15xf32>, vector<16x1xf32> -> vector<16x16xf32>
    %125 = arith.subf %124, %1 : vector<16x16xf32>
    %126 = vector.extract_strided_slice %3 {offsets = [0, 1], sizes = [16, 15], strides = [1, 1]} : vector<16x16xf32> to vector<16x15xf32>
    %127 = vector.extract_strided_slice %3 {offsets = [0, 0], sizes = [16, 1], strides = [1, 1]} : vector<16x16xf32> to vector<16x1xf32>
    %128 = tpu.concatenate %126, %127 in 1 : vector<16x15xf32>, vector<16x1xf32> -> vector<16x16xf32>
    %129 = arith.subf %128, %3 : vector<16x16xf32>
    %130 = arith.mulf %125, %19 : vector<16x16xf32>
    %131 = arith.mulf %129, %17 : vector<16x16xf32>
    %132 = arith.subf %130, %131 : vector<16x16xf32>
    %133 = arith.mulf %132, %132 : vector<16x16xf32>
    %cst_67 = arith.constant 0.00416666688 : f32
    %134 = vector.broadcast %cst_67 : f32 to vector<16x16xf32>
    %135 = arith.mulf %134, %133 : vector<16x16xf32>
    %136 = arith.addf %121, %135 : vector<16x16xf32>
    %137 = arith.mulf %125, %125 : vector<16x16xf32>
    %138 = arith.mulf %129, %129 : vector<16x16xf32>
    %139 = arith.addf %137, %138 : vector<16x16xf32>
    %140 = arith.mulf %23, %139 : vector<16x16xf32>
    %141 = arith.addf %136, %140 : vector<16x16xf32>
    %cst_68 = arith.constant 0.700000048 : f32
    %142 = vector.broadcast %cst_68 : f32 to vector<16x16xf32>
    %143 = arith.addf %3, %142 : vector<16x16xf32>
    %cst_69 = arith.constant 0.700000048 : f32
    %144 = vector.broadcast %cst_69 : f32 to vector<16x16xf32>
    %145 = arith.subf %3, %144 : vector<16x16xf32>
    %cst_70 = arith.constant 0.466666698 : f32
    %146 = vector.broadcast %cst_70 : f32 to vector<16x16xf32>
    %147 = arith.addf %1, %146 : vector<16x16xf32>
    %cst_71 = arith.constant 0.466666698 : f32
    %148 = vector.broadcast %cst_71 : f32 to vector<16x16xf32>
    %149 = arith.subf %1, %148 : vector<16x16xf32>
    %cst_72 = arith.constant -0.700000048 : f32
    %150 = vector.broadcast %cst_72 : f32 to vector<16x16xf32>
    %151 = arith.cmpf ogt, %3, %150 : vector<16x16xf32>
    %152 = arith.mulf %143, %143 : vector<16x16xf32>
    %cst_73 = arith.constant 0.000000e+00 : f32
    %153 = vector.broadcast %cst_73 : f32 to vector<16x16xf32>
    %154 = arith.select %151, %152, %153 : vector<16x16xi1>, vector<16x16xf32>
    %155 = arith.mulf %25, %154 : vector<16x16xf32>
    %156 = arith.addf %141, %155 : vector<16x16xf32>
    %cst_74 = arith.constant 0.700000048 : f32
    %157 = vector.broadcast %cst_74 : f32 to vector<16x16xf32>
    %158 = arith.cmpf olt, %3, %157 : vector<16x16xf32>
    %159 = arith.mulf %145, %145 : vector<16x16xf32>
    %cst_75 = arith.constant 0.000000e+00 : f32
    %160 = vector.broadcast %cst_75 : f32 to vector<16x16xf32>
    %161 = arith.select %158, %159, %160 : vector<16x16xi1>, vector<16x16xf32>
    %162 = arith.mulf %27, %161 : vector<16x16xf32>
    %163 = arith.addf %156, %162 : vector<16x16xf32>
    %cst_76 = arith.constant -0.466666698 : f32
    %164 = vector.broadcast %cst_76 : f32 to vector<16x16xf32>
    %165 = arith.cmpf ogt, %1, %164 : vector<16x16xf32>
    %166 = arith.mulf %147, %147 : vector<16x16xf32>
    %cst_77 = arith.constant 0.000000e+00 : f32
    %167 = vector.broadcast %cst_77 : f32 to vector<16x16xf32>
    %168 = arith.select %165, %166, %167 : vector<16x16xi1>, vector<16x16xf32>
    %169 = arith.mulf %29, %168 : vector<16x16xf32>
    %170 = arith.addf %163, %169 : vector<16x16xf32>
    %cst_78 = arith.constant 0.466666698 : f32
    %171 = vector.broadcast %cst_78 : f32 to vector<16x16xf32>
    %172 = arith.cmpf olt, %1, %171 : vector<16x16xf32>
    %173 = arith.mulf %149, %149 : vector<16x16xf32>
    %cst_79 = arith.constant 0.000000e+00 : f32
    %174 = vector.broadcast %cst_79 : f32 to vector<16x16xf32>
    %175 = arith.select %172, %173, %174 : vector<16x16xi1>, vector<16x16xf32>
    %176 = arith.mulf %31, %175 : vector<16x16xf32>
    %177 = arith.addf %170, %176 : vector<16x16xf32>
    %178 = arith.subf %3, %7 : vector<16x16xf32>
    %179 = arith.subf %1, %5 : vector<16x16xf32>
    %180 = arith.mulf %178, %178 : vector<16x16xf32>
    %181 = arith.mulf %33, %180 : vector<16x16xf32>
    %182 = arith.mulf %179, %179 : vector<16x16xf32>
    %183 = arith.mulf %35, %182 : vector<16x16xf32>
    %184 = arith.addf %181, %183 : vector<16x16xf32>
    %185 = vector.shape_cast %177 : vector<16x16xf32> to vector<1x16x16xf32>
    %cst_80 = arith.constant dense<0.000000e+00> : vector<1xf32>
    %186 = vector.multi_reduction <add>, %185, %cst_80 [1, 2] : vector<1x16x16xf32> to vector<1xf32>
    %187 = vector.shape_cast %186 : vector<1xf32> to vector<1x1x1xf32>
    %188 = vector.extract %187[0, 0, 0] : f32 from vector<1x1x1xf32>
    %189 = vector.shape_cast %184 : vector<16x16xf32> to vector<1x16x16xf32>
    %cst_81 = arith.constant dense<0.000000e+00> : vector<1xf32>
    %190 = vector.multi_reduction <add>, %189, %cst_81 [1, 2] : vector<1x16x16xf32> to vector<1xf32>
    %191 = vector.shape_cast %190 : vector<1xf32> to vector<1x1x1xf32>
    %192 = vector.extract %191[0, 0, 0] : f32 from vector<1x1x1xf32>
    %cst_82 = arith.constant 1.000000e+08 : f32
    %193 = arith.mulf %cst_82, %192 : f32
    %194 = arith.addf %188, %193 : f32
    %195 = arith.addf %194, %101 : f32
    %c0_83 = arith.constant 0 : index
    %c0_84 = arith.constant 0 : index
    %196 = memref.load %arg3[%c0_83, %c0_84] : memref<1x1xf32, #tpu.memory_space<smem>>
    memref.store %195, %arg3[%c0_83, %c0_84] : memref<1x1xf32, #tpu.memory_space<smem>>
    return
  }
}

</mosaic_0001>

<llo_original>
// kernel: energy.1
$region0: #{energy.1}
  #allocation0 [shape = 'u32[]', space=smem, size = 0x4, offset = 0x4, fixed_abs, tag = 'smem constant byte address 0x4 - core index']
  #allocation1 [shape = 'u32[144,128]{1,0:T(1,128)}', space=vmem, size = 0x12000, scoped, tag = 'internal scratch']
  %s0 = inlined_call_operand.vmem [shape: f32[2,4], index: 0, kind: input, shape index: {}]
  %s1 = inlined_call_operand.hbm [shape: f32[18,16,16], index: 1, kind: input, shape index: {}]
  %s2 = inlined_call_operand.vmem [shape: f32[2,16,16], index: 2, kind: input, shape index: {}]
  %s3 = inlined_call_operand.hbm [shape: f32[1,1], index: 3, kind: output, shape index: {}]
  %s4 = sld [smem:[#allocation0]]
  $region30: #{energy.1} parent=0
    _
  %s6 = ssub.s32 1, %s4
  %s7 = scalar_select 0, %s6, %s4
  $region1: #{energy.1} parent=0
    #allocation2 [shape = 'u8[1024]{0}', space=smem, size = 0x400, scoped, tag = 'input window, operand 0, single buffered']
    #allocation3 [shape = 's32[1]{0}', space=sflag, size = 0x4, scoped, tag = 'scoped memory for energy.1']
    #allocation4 [shape = 's32[1]{0}', space=sflag, size = 0x4, scoped, tag = 'scoped memory for energy.1']
    #allocation5 [shape = 's32[1]{0}', space=sflag, size = 0x4, scoped, tag = 'scoped memory for energy.1']
    #allocation6 [shape = 'u8[147456]{0}', space=vmem, size = 0x24000, scoped, tag = 'input window, operand 1, single buffered']
    #allocation7 [shape = 'u8[512]{0}', space=smem, size = 0x200, scoped, tag = 'output window, operand 0, single buffered']
    %8 = vsyncpa [#allocation5], 0
    %9 = vsyncpa [#allocation3], 0
    %10 = vsyncpa [#allocation4], 0
    // Predicated region
    $region2: #{energy.1} parent=1 // pred_check
      _
    $region3: #{energy.1} parent=1 // pred_check_branch
      %12 = sbr.rel (0) target = $region5
    $region4: #{energy.1} parent=1 // pred_region
      %s14 = ssub.s32 32, 32
      %15 = vsyncadd [#allocation5], %s14
      %s17 = sshll.u32 %s0, 4
      %s18 = int_to_ptr.vmem [resolvable:$true] %s17
      %20 = dma.vmem_to_smem %s18, 32, [#allocation2], [#allocation5]
    $region5: #{energy.1} parent=1 // pred_fallthru
      _
    // Predicated region
    $region6: #{energy.1} parent=1 // pred_check
      _
    $region7: #{energy.1} parent=1 // pred_check_branch
      %22 = sbr.rel (0) target = $region9
    $region8: #{energy.1} parent=1 // pred_region
      %s24 = ssub.s32 4608, 4608
      %25 = vsyncadd [#allocation3], %s24
      %s26 = sshll.u32 [#allocation6], 4
      %s27 = int_to_ptr.vmem [resolvable:$true] %s26
      %32 = dma.hbm_to_vmem [thread:$0]  %s1, 4608, %s27, [#allocation3], 128, 128, 8
    $region9: #{energy.1} parent=1 // pred_fallthru
      _
    // Predicated region
    $region10: #{energy.1} parent=1 // pred_check
      _
    $region11: #{energy.1} parent=1 // pred_check_branch
      %34 = sbr.rel (0) target = $region13
    $region12: #{energy.1} parent=1 // pred_region
      _
    $region13: #{energy.1} parent=1 // pred_fallthru
      _
    // Predicated region
    $region14: #{energy.1} parent=1 // pred_check
      _
    $region15: #{energy.1} parent=1 // pred_check_branch
      %36 = sbr.rel (0) target = $region17
    $region16: #{energy.1} parent=1 // pred_region
      %37 = dma.done [#allocation5], 32
    $region17: #{energy.1} parent=1 // pred_fallthru
      _
    // Predicated region
    $region18: #{energy.1} parent=1 // pred_check
      _
    $region19: #{energy.1} parent=1 // pred_check_branch
      %39 = sbr.rel (0) target = $region21
    $region20: #{energy.1} parent=1 // pred_region
      %40 = dma.done [#allocation3], 4608
    $region21: #{energy.1} parent=1 // pred_fallthru
      _
    %41 = sfence
    %v42 = vld [vmem:[%s2] sm:$0xff]
    %v43 = vld [vmem:[%s2 + $0x8] sm:$0xff]
    %s44 = scalar_lea.vmem %s2, 16
    %v45 = vld [vmem:[%s44] sm:$0xff]
    %v46 = vld [vmem:[%s44 + $0x8] sm:$0xff]
    %v47 = vld [vmem:[#allocation6] sm:$0xff]
    %v48 = vld [vmem:[#allocation6 + $0x8] sm:$0xff]
    %s49 = scalar_lea.vmem [#allocation6], 16
    %v50 = vld [vmem:[%s49] sm:$0xff]
    %v51 = vld [vmem:[%s49 + $0x8] sm:$0xff]
    %s52 = scalar_lea.vmem [#allocation6], 32
    %v53 = vld [vmem:[%s52] sm:$0xff]
    %v54 = vld [vmem:[%s52 + $0x8] sm:$0xff]
    %s55 = scalar_lea.vmem [#allocation6], 48
    %v56 = vld [vmem:[%s55] sm:$0xff]
    %v57 = vld [vmem:[%s55 + $0x8] sm:$0xff]
    %s58 = scalar_lea.vmem [#allocation6], 64
    %v59 = vld [vmem:[%s58] sm:$0xff]
    %v60 = vld [vmem:[%s58 + $0x8] sm:$0xff]
    %s61 = scalar_lea.vmem [#allocation6], 80
    %v62 = vld [vmem:[%s61] sm:$0xff]
    %v63 = vld [vmem:[%s61 + $0x8] sm:$0xff]
    %s64 = scalar_lea.vmem [#allocation6], 96
    %v65 = vld [vmem:[%s64] sm:$0xff]
    %v66 = vld [vmem:[%s64 + $0x8] sm:$0xff]
    %s67 = scalar_lea.vmem [#allocation6], 112
    %v68 = vld [vmem:[%s67] sm:$0xff]
    %v69 = vld [vmem:[%s67 + $0x8] sm:$0xff]
    %s70 = scalar_lea.vmem [#allocation6], 128
    %v71 = vld [vmem:[%s70] sm:$0xff]
    %v72 = vld [vmem:[%s70 + $0x8] sm:$0xff]
    %s73 = scalar_lea.vmem [#allocation6], 144
    %v74 = vld [vmem:[%s73] sm:$0xff]
    %v75 = vld [vmem:[%s73 + $0x8] sm:$0xff]
    %s76 = scalar_lea.vmem [#allocation6], 160
    %v77 = vld [vmem:[%s76] sm:$0xff]
    %v78 = vld [vmem:[%s76 + $0x8] sm:$0xff]
    %s79 = scalar_lea.vmem [#allocation6], 176
    %v80 = vld [vmem:[%s79] sm:$0xff]
    %v81 = vld [vmem:[%s79 + $0x8] sm:$0xff]
    %s82 = scalar_lea.vmem [#allocation6], 192
    %v83 = vld [vmem:[%s82] sm:$0xff]
    %v84 = vld [vmem:[%s82 + $0x8] sm:$0xff]
    %s85 = scalar_lea.vmem [#allocation6], 208
    %v86 = vld [vmem:[%s85] sm:$0xff]
    %v87 = vld [vmem:[%s85 + $0x8] sm:$0xff]
    %s88 = scalar_lea.vmem [#allocation6], 224
    %v89 = vld [vmem:[%s88] sm:$0xff]
    %v90 = vld [vmem:[%s88 + $0x8] sm:$0xff]
    %s91 = scalar_lea.vmem [#allocation6], 240
    %v92 = vld [vmem:[%s91] sm:$0xff]
    %v93 = vld [vmem:[%s91 + $0x8] sm:$0xff]
    %s94 = sld [smem:[#allocation2]]
    %s95 = sld [smem:[#allocation2 + $0x1]]
    %s96 = sld [smem:[#allocation2 + $0x2]]
    %s97 = sld [smem:[#allocation2 + $0x3]]
    %v98 = vstv %s94
    %v99 = vmul.f32 %v98, %v53
    %v100 = vmul.f32 %v98, %v54
    %v101 = vstv %s95
    %v102 = vmul.f32 %v101, %v56
    %v103 = vmul.f32 %v101, %v57
    %v104 = vadd.f32 %v99, %v102
    %v105 = vadd.f32 %v100, %v103
    %v106 = vstv %s96
    %v107 = vadd.f32 %v104, %v106
    %v108 = vadd.f32 %v105, %v106
    %v109 = vsub.f32 %v42, %v107
    %v110 = vsub.f32 %v43, %v108
    %s111 = ssub.f32 0.0, %s95
    %v112 = vstv %s111
    %v113 = vmul.f32 %v112, %v53
    %v114 = vmul.f32 %v112, %v54
    %v115 = vmul.f32 %v98, %v56
    %v116 = vmul.f32 %v98, %v57
    %v117 = vadd.f32 %v113, %v115
    %v118 = vadd.f32 %v114, %v116
    %v119 = vstv %s97
    %v120 = vadd.f32 %v117, %v119
    %v121 = vadd.f32 %v118, %v119
    %v122 = vsub.f32 %v45, %v120
    %v123 = vsub.f32 %v46, %v121
    %s124 = scalar_lea.vmem [#allocation6], 256
    %v125 = vld [vmem:[%s124] sm:$0xff]
    %v126 = vld [vmem:[%s124 + $0x8] sm:$0xff]
    %v127 = vmul.f32 %v109, %v109
    %v128 = vmul.f32 %v110, %v110
    %v129 = vmul.f32 %v122, %v122
    %v130 = vmul.f32 %v123, %v123
    %v131 = vadd.f32 %v127, %v129
    %v132 = vadd.f32 %v128, %v130
    %v133 = vmul.f32 %v125, %v131
    %v134 = vmul.f32 %v126, %v132
    %v135 = vadd.f32 %v133, 0.0
    %v136 = vadd.f32 %v134, 0.0
    %s137 = ssub.f32 %s94, 1.0
    %s138 = smul.f32 %s137, %s137
    %s139 = sadd.f32 %s138, 0.0
    %s140 = sld [smem:[#allocation2 + $0x80]]
    %s141 = sld [smem:[#allocation2 + $0x81]]
    %s142 = sld [smem:[#allocation2 + $0x82]]
    %s143 = sld [smem:[#allocation2 + $0x83]]
    %v144 = vstv %s140
    %v145 = vmul.f32 %v144, %v53
    %v146 = vmul.f32 %v144, %v54
    %v147 = vstv %s141
    %v148 = vmul.f32 %v147, %v56
    %v149 = vmul.f32 %v147, %v57
    %v150 = vadd.f32 %v145, %v148
    %v151 = vadd.f32 %v146, %v149
    %v152 = vstv %s142
    %v153 = vadd.f32 %v150, %v152
    %v154 = vadd.f32 %v151, %v152
    %v155 = vsub.f32 %v42, %v153
    %v156 = vsub.f32 %v43, %v154
    %s157 = ssub.f32 0.0, %s141
    %v158 = vstv %s157
    %v159 = vmul.f32 %v158, %v53
    %v160 = vmul.f32 %v158, %v54
    %v161 = vmul.f32 %v144, %v56
    %v162 = vmul.f32 %v144, %v57
    %v163 = vadd.f32 %v159, %v161
    %v164 = vadd.f32 %v160, %v162
    %v165 = vstv %s143
    %v166 = vadd.f32 %v163, %v165
    %v167 = vadd.f32 %v164, %v165
    %v168 = vsub.f32 %v45, %v166
    %v169 = vsub.f32 %v46, %v167
    %s170 = scalar_lea.vmem [#allocation6], 272
    %v171 = vld [vmem:[%s170] sm:$0xff]
    %v172 = vld [vmem:[%s170 + $0x8] sm:$0xff]
    %v173 = vmul.f32 %v155, %v155
    %v174 = vmul.f32 %v156, %v156
    %v175 = vmul.f32 %v168, %v168
    %v176 = vmul.f32 %v169, %v169
    %v177 = vadd.f32 %v173, %v175
    %v178 = vadd.f32 %v174, %v176
    %v179 = vmul.f32 %v171, %v177
    %v180 = vmul.f32 %v172, %v178
    %v181 = vadd.f32 %v135, %v179
    %v182 = vadd.f32 %v136, %v180
    %s183 = ssub.f32 %s140, 1.0
    %s184 = smul.f32 %s183, %s183
    %s185 = sadd.f32 %s139, %s184
    %s186 = smul.f32 %s185, 4000.0
    %vm189 = vcmask 1046528
    %v190 = vrot.slane %v42, 1
    %v191 = vrot.slane %v43, 1
    %v192 = vsel %vm189, %v190, %v191
    %v196 = vsel %vm189, %v191, %v190
    %v197 = vsub.f32 %v192, %v42
    %v198 = vsub.f32 %v196, %v43
    %v201 = vrot.slane %v45, 1
    %v202 = vrot.slane %v46, 1
    %v203 = vsel %vm189, %v201, %v202
    %v207 = vsel %vm189, %v202, %v201
    %v208 = vsub.f32 %v203, %v45
    %v209 = vsub.f32 %v207, %v46
    %v210 = vmul.f32 %v197, %v62
    %v211 = vmul.f32 %v198, %v63
    %v212 = vmul.f32 %v208, %v59
    %v213 = vmul.f32 %v209, %v60
    %v214 = vsub.f32 %v210, %v212
    %v215 = vsub.f32 %v211, %v213
    %v216 = vmul.f32 %v214, %v214
    %v217 = vmul.f32 %v215, %v215
    %v218 = vmul.f32 %v216, 0.004166667
    %v219 = vmul.f32 %v217, 0.004166667
    %v220 = vadd.f32 %v181, %v218
    %v221 = vadd.f32 %v182, %v219
    %v222 = vmul.f32 %v197, %v197
    %v223 = vmul.f32 %v198, %v198
    %v224 = vmul.f32 %v208, %v208
    %v225 = vmul.f32 %v209, %v209
    %v226 = vadd.f32 %v222, %v224
    %v227 = vadd.f32 %v223, %v225
    %v228 = vmul.f32 %v71, %v226
    %v229 = vmul.f32 %v72, %v227
    %v230 = vadd.f32 %v220, %v228
    %v231 = vadd.f32 %v221, %v229
    %232 = vrot.lane.b32.xlu0 %v42, 127
    %v233 = vpop.permute.xlu0 %232
    %234 = vrot.lane.b32.xlu0 %v43, 127
    %v235 = vpop.permute.xlu0 %234
    %238 = vrot.lane.b32.xlu0 %v42, 15
    %v239 = vpop.permute.xlu0 %238
    %240 = vrot.lane.b32.xlu0 %v43, 15
    %v241 = vpop.permute.xlu0 %240
    %vm244 = vcmask 121856
    %v245 = vsel %vm244, %v233, %v239
    %v246 = vsel %vm244, %v235, %v241
    %v247 = vsub.f32 %v245, %v42
    %v248 = vsub.f32 %v246, %v43
    %249 = vrot.lane.b32.xlu0 %v45, 127
    %v250 = vpop.permute.xlu0 %249
    %251 = vrot.lane.b32.xlu0 %v46, 127
    %v252 = vpop.permute.xlu0 %251
    %255 = vrot.lane.b32.xlu0 %v45, 15
    %v256 = vpop.permute.xlu0 %255
    %257 = vrot.lane.b32.xlu0 %v46, 15
    %v258 = vpop.permute.xlu0 %257
    %v261 = vsel %vm244, %v250, %v256
    %v262 = vsel %vm244, %v252, %v258
    %v263 = vsub.f32 %v261, %v45
    %v264 = vsub.f32 %v262, %v46
    %v265 = vmul.f32 %v247, %v68
    %v266 = vmul.f32 %v248, %v69
    %v267 = vmul.f32 %v263, %v65
    %v268 = vmul.f32 %v264, %v66
    %v269 = vsub.f32 %v265, %v267
    %v270 = vsub.f32 %v266, %v268
    %v271 = vmul.f32 %v269, %v269
    %v272 = vmul.f32 %v270, %v270
    %v273 = vmul.f32 %v271, 0.004166667
    %v274 = vmul.f32 %v272, 0.004166667
    %v275 = vadd.f32 %v230, %v273
    %v276 = vadd.f32 %v231, %v274
    %v277 = vmul.f32 %v247, %v247
    %v278 = vmul.f32 %v248, %v248
    %v279 = vmul.f32 %v263, %v263
    %v280 = vmul.f32 %v264, %v264
    %v281 = vadd.f32 %v277, %v279
    %v282 = vadd.f32 %v278, %v280
    %v283 = vmul.f32 %v74, %v281
    %v284 = vmul.f32 %v75, %v282
    %v285 = vadd.f32 %v275, %v283
    %v286 = vadd.f32 %v276, %v284
    %v287 = vadd.f32 %v45, 0.70000005
    %v288 = vadd.f32 %v46, 0.70000005
    %v289 = vsub.f32 %v45, 0.70000005
    %v290 = vsub.f32 %v46, 0.70000005
    %v291 = vadd.f32 %v42, 0.4666667
    %v292 = vadd.f32 %v43, 0.4666667
    %v293 = vsub.f32 %v42, 0.4666667
    %v294 = vsub.f32 %v43, 0.4666667
    %vm295 = vcmp.gt.f32.partialorder %v45, -0.70000005
    %vm296 = vcmp.gt.f32.partialorder %v46, -0.70000005
    %v297 = vmul.f32 %v287, %v287
    %v298 = vmul.f32 %v288, %v288
    %v299 = vsel %vm295, %v297, 0.0
    %v300 = vsel %vm296, %v298, 0.0
    %v301 = vmul.f32 %v77, %v299
    %v302 = vmul.f32 %v78, %v300
    %v303 = vadd.f32 %v285, %v301
    %v304 = vadd.f32 %v286, %v302
    %vm305 = vcmp.lt.f32.partialorder %v45, 0.70000005
    %vm306 = vcmp.lt.f32.partialorder %v46, 0.70000005
    %v307 = vmul.f32 %v289, %v289
    %v308 = vmul.f32 %v290, %v290
    %v309 = vsel %vm305, %v307, 0.0
    %v310 = vsel %vm306, %v308, 0.0
    %v311 = vmul.f32 %v80, %v309
    %v312 = vmul.f32 %v81, %v310
    %v313 = vadd.f32 %v303, %v311
    %v314 = vadd.f32 %v304, %v312
    %vm315 = vcmp.gt.f32.partialorder %v42, -0.4666667
    %vm316 = vcmp.gt.f32.partialorder %v43, -0.4666667
    %v317 = vmul.f32 %v291, %v291
    %v318 = vmul.f32 %v292, %v292
    %v319 = vsel %vm315, %v317, 0.0
    %v320 = vsel %vm316, %v318, 0.0
    %v321 = vmul.f32 %v83, %v319
    %v322 = vmul.f32 %v84, %v320
    %v323 = vadd.f32 %v313, %v321
    %v324 = vadd.f32 %v314, %v322
    %vm325 = vcmp.lt.f32.partialorder %v42, 0.4666667
    %vm326 = vcmp.lt.f32.partialorder %v43, 0.4666667
    %v327 = vmul.f32 %v293, %v293
    %v328 = vmul.f32 %v294, %v294
    %v329 = vsel %vm325, %v327, 0.0
    %v330 = vsel %vm326, %v328, 0.0
    %v331 = vmul.f32 %v86, %v329
    %v332 = vmul.f32 %v87, %v330
    %v333 = vadd.f32 %v323, %v331
    %v334 = vadd.f32 %v324, %v332
    %v335 = vsub.f32 %v45, %v50
    %v336 = vsub.f32 %v46, %v51
    %v337 = vsub.f32 %v42, %v47
    %v338 = vsub.f32 %v43, %v48
    %v339 = vmul.f32 %v335, %v335
    %v340 = vmul.f32 %v336, %v336
    %v341 = vmul.f32 %v89, %v339
    %v342 = vmul.f32 %v90, %v340
    %v343 = vmul.f32 %v337, %v337
    %v344 = vmul.f32 %v338, %v338
    %v345 = vmul.f32 %v92, %v343
    %v346 = vmul.f32 %v93, %v344
    %v347 = vadd.f32 %v341, %v345
    %v348 = vadd.f32 %v342, %v346
    %vm349 = vcmask 130048
    %v350 = vsel %vm349, %v333, 0.0
    %v351 = vsel %vm349, %v334, 0.0
    %v352 = vadd.f32 %v350, %v351
    %353 = vadd.xlane.f32.xlu0 %v352
    %v354 = vpop.xlane.xlu0 %353
    %v355 = vrot.slane %v354, 4
    %v356 = vadd.f32 %v354, %v355
    %v357 = vrot.slane %v356, 2
    %v358 = vadd.f32 %v356, %v357
    %v359 = vrot.slane %v358, 1
    %v360 = vadd.f32 %v358, %v359
    %s361 = vtos %v360
    %v362 = vsel %vm349, %v347, 0.0
    %v363 = vsel %vm349, %v348, 0.0
    %v364 = vadd.f32 %v362, %v363
    %365 = vadd.xlane.f32.xlu0 %v364
    %v366 = vpop.xlane.xlu0 %365
    %v367 = vrot.slane %v366, 4
    %v368 = vadd.f32 %v366, %v367
    %v369 = vrot.slane %v368, 2
    %v370 = vadd.f32 %v368, %v369
    %v371 = vrot.slane %v370, 1
    %v372 = vadd.f32 %v370, %v371
    %s373 = vtos %v372
    %s374 = smul.f32 %s373, 1e+08
    %s375 = sadd.f32 %s361, %s374
    %s376 = sadd.f32 %s375, %s186
    %s377 = scalar_lea.smem [#allocation7], 0
    %378 = sst [smem:[%s377]] %s376
    // Predicated region
    $region22: #{energy.1} parent=1 // pred_check
      _
    $region23: #{energy.1} parent=1 // pred_check_branch
      %380 = sbr.rel (0) target = $region25
    $region24: #{energy.1} parent=1 // pred_region
      %s382 = ssub.s32 16, 16
      %383 = vsyncadd [#allocation4], %s382
      %386 = dma.smem_to_hbm [#allocation7], 16, %s3, [#allocation4]
    $region25: #{energy.1} parent=1 // pred_fallthru
      _
    // Predicated region
    $region26: #{energy.1} parent=1 // pred_check
      _
    $region27: #{energy.1} parent=1 // pred_check_branch
      %388 = sbr.rel (0) target = $region29
    $region28: #{energy.1} parent=1 // pred_region
      %389 = dma.done [#allocation4], 16
    $region29: #{energy.1} parent=1 // pred_fallthru
      _
    %390 = sfence
    %391 = vsyncpa [#allocation3], 1
    %392 = vsyncpa [#allocation4], 1
    %393 = vsyncpa [#allocation5], 1

</llo_original>
